<compile_context>
chip_gen: v7x
topology: tpu7x:2x2x1
jax: 0.10.0
libtpu: 0.0.40
codegen_flags: <defaults>
</compile_context>

<pallas_src>
import functools

import jax
import jax.numpy as jnp
from jax import lax
from jax.experimental import pallas as pl
from jax.experimental.pallas import tpu as pltpu


def _entropy_kernel(x_ref, o_ref, *, hw, tile_hw):
    t = pl.program_id(1)

    # Init the per-batch partial accumulator on the first reduction step.
    @pl.when(t == 0)
    def _():
        o_ref[...] = jnp.zeros_like(o_ref)

    x = x_ref[...].astype(jnp.float32)               # (1, C, TILE_HW)
    m = jnp.max(x, axis=1, keepdims=True)            # (1, 1, TILE_HW)
    xm = x - m
    e = jnp.exp(xm)                                  # (1, C, TILE_HW)
    s = jnp.sum(e, axis=1, keepdims=True)            # (1, 1, TILE_HW)
    dot = jnp.sum(e * xm, axis=1, keepdims=True)     # (1, 1, TILE_HW)

    # Per-column entropy: log(sum_e) - sum(e*(x-m)) / sum_e
    ent = jnp.log(s) - dot / s                       # (1, 1, TILE_HW)

    # Mask columns that are padding (beyond the real H*W extent).
    col = t * tile_hw + lax.broadcasted_iota(jnp.int32, ent.shape, 2)
    ent = jnp.where(col < hw, ent, 0.0)

    # Lane-dense VPU accumulate into the resident output block.
    o_ref[...] += ent


def entropy_loss(x, max_tile_hw=2048):
    """x: NCHW array (f32 or bf16). Returns scalar entropy loss (float32)."""
    n, c, h, w = x.shape
    hw = h * w

    # Free contiguous reshape; channel axis stays second (-> sublane axis).
    x3 = x.reshape(n, c, hw)

    def _round_up(a, b):
        return (a + b - 1) // b * b

    tile_hw = min(max_tile_hw, _round_up(hw, 128))   # lane-dense, multiple of 128
    hw_pad = _round_up(hw, tile_hw)
    if hw_pad != hw:
        # Padded columns are masked out inside the kernel.
        x3 = jnp.pad(x3, ((0, 0), (0, 0), (0, hw_pad - hw)))
    num_t = hw_pad // tile_hw

    kernel = functools.partial(_entropy_kernel, hw=hw, tile_hw=tile_hw)

    # VMEM budget (double-buffered input block + resident output block).
    itemsize = jnp.dtype(x.dtype).itemsize
    block_in_bytes = c * tile_hw * itemsize
    block_out_bytes = tile_hw * 4
    vmem_need = 2 * (block_in_bytes + block_out_bytes) + (1 << 20)

    cp_kwargs = dict(dimension_semantics=("parallel", "arbitrary"))
    if vmem_need > 16 * 1024 * 1024:          # above the smallest default scoped limit
        cp_kwargs["vmem_limit_bytes"] = int(min(2 * vmem_need, 64 * 1024 * 1024))

    cost = pl.CostEstimate(
        flops=6 * n * c * hw,
        transcendentals=n * c * hw + n * hw,          # exp per element + log per column
        bytes_accessed=n * c * hw_pad * itemsize + n * tile_hw * 4,
    )

    partials = pl.pallas_call(
        kernel,
        out_shape=jax.ShapeDtypeStruct((n, 1, tile_hw), jnp.float32),
        grid_spec=pltpu.PrefetchScalarGridSpec(
            num_scalar_prefetch=0,
            grid=(n, num_t),
            in_specs=[pl.BlockSpec((1, c, tile_hw), lambda i, t: (i, 0, t))],
            out_specs=pl.BlockSpec((1, 1, tile_hw), lambda i, t: (i, 0, 0)),
        ),
        compiler_params=pltpu.CompilerParams(**cp_kwargs),
        cost_estimate=cost,
    )(x3)

    # Tiny final reduction over (N, 1, TILE_HW) partials outside the kernel.
    return jnp.sum(partials)


if __name__ == "__main__":
    key = jax.random.PRNGKey(0)
    # Small NCHW input consistent with the module's forward (softmax over dim=1).
    x = jax.random.normal(key, (2, 4, 16, 16), dtype=jnp.float32)

    result = entropy_loss(x)
    jax.block_until_ready(result)

    # Pure-JAX reference (same math as the PyTorch module).
    p = jax.nn.softmax(x, axis=1)
    logp = jax.nn.log_softmax(x, axis=1)
    ref = -jnp.sum(p * logp)
    assert jnp.allclose(result, ref, rtol=1e-4, atol=1e-4), (result, ref)

    print("KERNEL_OK")
</pallas_src>

<mosaic_0001>
module attributes {stable_mosaic.version = 11 : i64} {
  func.func @_entropy_kernel(%arg0: i32, %arg1: i32, %arg2: memref<1x4x256xf32, #tpu.memory_space<vmem>>, %arg3: memref<1x1x256xf32, #tpu.memory_space<vmem>>) attributes {dimension_semantics = [#tpu.dimension_semantics<parallel>, #tpu.dimension_semantics<arbitrary>], iteration_bounds = array<i64: 2, 1>, scalar_prefetch = 0 : i64, scratch_operands = 0 : i64, tpu.core_type = #tpu.core_type<tc>, window_params = [{transform_indices = @transform_0, window_bounds = array<i64: 1, 4, 256>}, {transform_indices = @transform_1, window_bounds = array<i64: 1, 1, 256>}]} {
    %c0_i32 = arith.constant 0 : i32
    %0 = arith.cmpi eq, %arg1, %c0_i32 : i32
    %1 = arith.extui %0 : i1 to i32
    %c0_i32_0 = arith.constant 0 : i32
    %2 = arith.cmpi ne, %1, %c0_i32_0 : i32
    scf.if %2 {
      %cst_13 = arith.constant 0.000000e+00 : f32
      %28 = vector.broadcast %cst_13 : f32 to vector<1x1x256xf32>
      %c0_14 = arith.constant 0 : index
      %c0_15 = arith.constant 0 : index
      %c0_16 = arith.constant 0 : index
      %29 = vector.load %arg3[%c0_14, %c0_15, %c0_16] : memref<1x1x256xf32, #tpu.memory_space<vmem>>, vector<1x1x256xf32>
      tpu.vector_store %arg3[%c0_14, %c0_15, %c0_16], %28 {strides = array<i32>} : memref<1x1x256xf32, #tpu.memory_space<vmem>>, vector<1x1x256xf32>,
    } else {
    }
    %c0 = arith.constant 0 : index
    %c0_1 = arith.constant 0 : index
    %c0_2 = arith.constant 0 : index
    %3 = vector.load %arg2[%c0, %c0_1, %c0_2] : memref<1x4x256xf32, #tpu.memory_space<vmem>>, vector<1x4x256xf32>
    %cst = arith.constant dense<0xFF800000> : vector<1x256xf32>
    %4 = vector.multi_reduction <maximumf>, %3, %cst [1] : vector<1x4x256xf32> to vector<1x256xf32>
    %5 = vector.shape_cast %4 : vector<1x256xf32> to vector<1x1x256xf32>
    %6 = vector.broadcast %5 : vector<1x1x256xf32> to vector<1x4x256xf32>
    %7 = arith.subf %3, %6 : vector<1x4x256xf32>
    %8 = math.exp %7 : vector<1x4x256xf32>
    %cst_3 = arith.constant dense<0.000000e+00> : vector<1x256xf32>
    %9 = vector.multi_reduction <add>, %8, %cst_3 [1] : vector<1x4x256xf32> to vector<1x256xf32>
    %10 = vector.shape_cast %9 : vector<1x256xf32> to vector<1x1x256xf32>
    %11 = arith.mulf %8, %7 : vector<1x4x256xf32>
    %cst_4 = arith.constant dense<0.000000e+00> : vector<1x256xf32>
    %12 = vector.multi_reduction <add>, %11, %cst_4 [1] : vector<1x4x256xf32> to vector<1x256xf32>
    %13 = vector.shape_cast %12 : vector<1x256xf32> to vector<1x1x256xf32>
    %14 = math.log %10 : vector<1x1x256xf32>
    %15 = arith.divf %13, %10 : vector<1x1x256xf32>
    %16 = arith.subf %14, %15 : vector<1x1x256xf32>
    %c256_i32 = arith.constant 256 : i32
    %17 = arith.muli %arg1, %c256_i32 : i32
    %18 = tpu.iota {dimensions = array<i32: 2>} : vector<1x1x256xi32>
    %19 = vector.broadcast %17 : i32 to vector<1x1x256xi32>
    %20 = arith.addi %19, %18 : vector<1x1x256xi32>
    %c256_i32_5 = arith.constant 256 : i32
    %21 = vector.broadcast %c256_i32_5 : i32 to vector<1x1x256xi32>
    %22 = arith.cmpi slt, %20, %21 : vector<1x1x256xi32>
    %cst_6 = arith.constant 0.000000e+00 : f32
    %23 = vector.broadcast %cst_6 : f32 to vector<1x1x256xf32>
    %24 = arith.select %22, %16, %23 : vector<1x1x256xi1>, vector<1x1x256xf32>
    %c0_7 = arith.constant 0 : index
    %c0_8 = arith.constant 0 : index
    %c0_9 = arith.constant 0 : index
    %25 = vector.load %arg3[%c0_7, %c0_8, %c0_9] : memref<1x1x256xf32, #tpu.memory_space<vmem>>, vector<1x1x256xf32>
    %26 = arith.addf %25, %24 : vector<1x1x256xf32>
    %c0_10 = arith.constant 0 : index
    %c0_11 = arith.constant 0 : index
    %c0_12 = arith.constant 0 : index
    %27 = vector.load %arg3[%c0_10, %c0_11, %c0_12] : memref<1x1x256xf32, #tpu.memory_space<vmem>>, vector<1x1x256xf32>
    tpu.vector_store %arg3[%c0_10, %c0_11, %c0_12], %26 {strides = array<i32>} : memref<1x1x256xf32, #tpu.memory_space<vmem>>, vector<1x1x256xf32>,
    return
  }
  func.func @transform_0(%arg0: i32, %arg1: i32) -> (i32, i32, i32) {
    %c0_i32 = arith.constant 0 : i32
    %c0_i32_0 = arith.constant 0 : i32
    return %arg0, %c0_i32, %arg1 : i32, i32, i32
  }
  func.func @transform_1(%arg0: i32, %arg1: i32) -> (i32, i32, i32) {
    %c0_i32 = arith.constant 0 : i32
    %c0_i32_0 = arith.constant 0 : i32
    %c0_i32_1 = arith.constant 0 : i32
    return %arg0, %c0_i32, %c0_i32_0 : i32, i32, i32
  }
}

</mosaic_0001>

<llo_original>
// kernel: tpu_custom_call.1
$region0: #{tpu_custom_call.1}
  #allocation0 [shape = 'u32[]', space=smem, size = 0x4, offset = 0x4, fixed_abs, tag = 'smem constant byte address 0x4 - core index']
  #allocation1 [shape = 'u32[144,128]{1,0:T(1,128)}', space=vmem, size = 0x12000, scoped, tag = 'internal scratch']
  %s0 = inlined_call_operand.hbm [shape: f32[2,4,256], index: 0, kind: input, shape index: {}]
  %s1 = inlined_call_operand.hbm [shape: f32[2,1,256], index: 1, kind: output, shape index: {}]
  %s2 = sld [smem:[#allocation0]]
  $region45: #{tpu_custom_call.1} parent=0
    _
  %s4 = ssub.s32 1, %s2
  %s5 = scalar_select 0, %s4, %s2
  $region1: #{tpu_custom_call.1} parent=0
    #allocation2 [shape = 'u8[8192]{0}', space=vmem, size = 0x2000, scoped, tag = 'input window, operand 0']
    #allocation3 [shape = 's32[2]{0}', space=sflag, size = 0x8, scoped, tag = 'scoped memory for tpu_custom_call.1']
    #allocation4 [shape = 's32[2]{0}', space=sflag, size = 0x8, scoped, tag = 'scoped memory for tpu_custom_call.1']
    #allocation5 [shape = 'u8[2048]{0}', space=vmem, size = 0x800, scoped, tag = 'output window, operand 0']
    %6 = vsyncpa [#allocation3], 0
    %s7 = scalar_lea.sflag [#allocation3], 1
    %8 = vsyncpa %s7, 0
    %9 = vsyncpa [#allocation4], 0
    %s10 = scalar_lea.sflag [#allocation4], 1
    %11 = vsyncpa %s10, 0
    loop: start=0, step=1, limit=4
    $region2: #{tpu_custom_call.1} parent=1 // loop_pre_header
      _
    $region3: #{tpu_custom_call.1} parent=1 // loop_header
      %s13 = sphi 0, %s17
      %p14 = scmp.ge.s32.totalorder %s13, 4
      %s20 = sphi 0, %s32
      %s21 = sphi 0, %s28
      %s22 = sphi 0, %s20
      %s23 = sphi 0, %s21
      %s24 = sphi 0, %s22
      %s25 = sphi 0, %s23
      %s37 = sphi 0, %s39
      %s40 = sphi 0, %s37
      %s41 = sphi 0, %s40
      %s57 = sphi 0, %s41
      %s63 = sphi 0, %s65
      %s66 = sphi 0, %s63
      %s67 = sphi 0, %s66
      %s83 = sphi 0, %s67
    $region4: #{tpu_custom_call.1} parent=1 // loop_header_branch
      %16 = sbr.rel (%p14) target = $region8
    $region5: #{tpu_custom_call.1} parent=1 // loop_body
      %s18 = ssub.s32 %s13, 1
      %s19 = ssub.s32 %s13, 2
      %s26 = sadd.s32 1, %s21
      %p27 = scmp.ge.s32.totalorder %s26, 1
      %s28 = scalar_select %p27, 0, %s26
      %s29 = sadd.s32 1, %s20
      %s30 = scalar_select %p27, %s29, %s20
      %p31 = scmp.ge.s32.totalorder %s30, 2
      %s32 = scalar_select %p31, 0, %s30
      %s33 = ssub.s32 %s20, %s32
      %s34 = ssub.s32 %s21, %s28
      %s35 = sor.u32 %s33, %s34
      %p36 = scmp.eq.s32.totalorder %s35, 0
      %s38 = sadd.s32 %s37, 1
      %s39 = scalar_select %p36, %s37, %s38
      %p42 = pneg %p36
      %p43 = scmp.eq.s32.totalorder %s13, 1
      %p44 = por %p42, %p43
      %p45 = scmp.ne.s32.totalorder %s37, %s40
      %p46 = scmp.eq.s32.totalorder %s13, 0
      %p47 = por %p45, %p46
      %p48 = scmp.ne.s32.totalorder %s37, %s40
      %p49 = scmp.eq.s32.totalorder %s18, 1
      %p50 = por %p48, %p49
      %p51 = scmp.ne.s32.totalorder %s40, %s41
      %p52 = scmp.eq.s32.totalorder %s18, 0
      %p53 = por %p51, %p52
      %p54 = scmp.ne.s32.totalorder %s40, %s41
      %p55 = scmp.eq.s32.totalorder %s19, 1
      %p56 = por %p54, %p55
      %p58 = scmp.ne.s32.totalorder %s41, %s57
      %p59 = scmp.eq.s32.totalorder %s19, 0
      %p60 = por %p58, %p59
      %s61 = ssub.s32 %s20, %s32
      %p62 = scmp.eq.s32.totalorder %s61, 0
      %s64 = sadd.s32 %s63, 1
      %s65 = scalar_select %p62, %s63, %s64
      %p68 = pneg %p62
      %p69 = scmp.eq.s32.totalorder %s13, 1
      %p70 = por %p68, %p69
      %p71 = scmp.ne.s32.totalorder %s63, %s66
      %p72 = scmp.eq.s32.totalorder %s13, 0
      %p73 = por %p71, %p72
      %p74 = scmp.ne.s32.totalorder %s63, %s66
      %p75 = scmp.eq.s32.totalorder %s18, 1
      %p76 = por %p74, %p75
      %p77 = scmp.ne.s32.totalorder %s66, %s67
      %p78 = scmp.eq.s32.totalorder %s18, 0
      %p79 = por %p77, %p78
      %p80 = scmp.ne.s32.totalorder %s66, %s67
      %p81 = scmp.eq.s32.totalorder %s19, 1
      %p82 = por %p80, %p81
      %p84 = scmp.ne.s32.totalorder %s67, %s83
      %p85 = scmp.eq.s32.totalorder %s19, 0
      %p86 = por %p84, %p85
      %p87 = scmp.le.s32.totalorder 1, %s13
      %p88 = scmp.lt.s32.totalorder %s13, 3
      %p89 = pnand %p87, %p88
      %p90 = pneg %p89
      // Predicated region
      $region9: #{tpu_custom_call.1} parent=5 // pred_check
        _
      $region10: #{tpu_custom_call.1} parent=5 // pred_check_branch
        %92 = sbr.rel (%p89) target = $region12
      $region11: #{tpu_custom_call.1} parent=5 // pred_region
        %s93 = ssub.s32 %s13, 1
      $region12: #{tpu_custom_call.1} parent=5 // pred_fallthru
        _
      %p94 = scmp.lt.s32.totalorder %s13, 2
      // Predicated region
      $region13: #{tpu_custom_call.1} parent=5 // pred_check
        %p95 = pneg %p94
      $region14: #{tpu_custom_call.1} parent=5 // pred_check_branch
        %97 = sbr.rel (%p95) target = $region16
      $region15: #{tpu_custom_call.1} parent=5 // pred_region
        // Predicated region
        $region17: #{tpu_custom_call.1} parent=15 // pred_check
          %p98 = pneg %p47
        $region18: #{tpu_custom_call.1} parent=15 // pred_check_branch
          %100 = sbr.rel (%p98) target = $region20
        $region19: #{tpu_custom_call.1} parent=15 // pred_region
          %s101 = sand.u32 %s37, 1
          %s102 = scalar_lea.sflag [#allocation3], %s101
          %s103 = sand.u32 %s37, 1
          %s104 = smul.addr %s103, 8
          %s105 = scalar_lea.vmem [#allocation2], %s104
          %s106 = smul.u32 2, %s21
          %s108 = ssub.s32 128, 128
          %109 = vsyncadd %s102, %s108
          %s110 = smul.addr %s20, 2
          %s111 = sadd.s32 %s106, %s110
          %s112 = smul.addr %s111, 64
          %s113 = scalar_lea.hbm %s0, %s112
          %s115 = sshll.u32 %s105, 4
          %s116 = int_to_ptr.vmem [resolvable:$true] %s115
          %118 = dma.hbm_to_vmem [thread:$0]  %s113, 128, %s116, %s102
        $region20: #{tpu_custom_call.1} parent=15 // pred_fallthru
          _
      $region16: #{tpu_custom_call.1} parent=5 // pred_fallthru
        _
      %p119 = scmp.le.s32.totalorder 1, %s13
      %p120 = scmp.lt.s32.totalorder %s13, 3
      %p121 = pnand %p119, %p120
      %p122 = pneg %p121
      // Predicated region
      $region21: #{tpu_custom_call.1} parent=5 // pred_check
        _
      $region22: #{tpu_custom_call.1} parent=5 // pred_check_branch
        %124 = sbr.rel (%p121) target = $region24
      $region23: #{tpu_custom_call.1} parent=5 // pred_region
        %s125 = ssub.s32 %s13, 1
        %s126 = sand.u32 %s40, 1
        %s127 = scalar_lea.sflag [#allocation3], %s126
        %s128 = sand.u32 %s40, 1
        %s129 = smul.addr %s128, 8
        %s130 = scalar_lea.vmem [#allocation2], %s129
        // Predicated region
        $region25: #{tpu_custom_call.1} parent=23 // pred_check
          %p131 = pneg %p53
        $region26: #{tpu_custom_call.1} parent=23 // pred_check_branch
          %133 = sbr.rel (%p131) target = $region28
        $region27: #{tpu_custom_call.1} parent=23 // pred_region
          %134 = dma.done %s127, 128
        $region28: #{tpu_custom_call.1} parent=23 // pred_fallthru
          _
        %s135 = sand.u32 %s40, 1
        %s136 = scalar_lea.sflag [#allocation3], %s135
        %s137 = sand.u32 %s40, 1
        %s138 = smul.addr %s137, 8
        %s139 = scalar_lea.vmem [#allocation2], %s138
        %p140 = pneg %p53
        %p141 = pneg %p50
        %p142 = pneg %p79
        %p143 = pneg %p76
        %s144 = sand.u32 %s66, 1
        %s145 = scalar_lea.sflag [#allocation4], %s144
        %s146 = sand.u32 %s66, 1
        %s147 = smul.addr %s146, 2
        %s148 = scalar_lea.vmem [#allocation5], %s147
        %s149 = smul.u32 2, %s23
        %p150 = scmp.eq.s32.totalorder %s23, 0
        // Predicated region
        $region29: #{tpu_custom_call.1} parent=23 // pred_check
          %p151 = pneg %p150
        $region30: #{tpu_custom_call.1} parent=23 // pred_check_branch
          %153 = sbr.rel (%p151) target = $region32
        $region31: #{tpu_custom_call.1} parent=23 // pred_region
          %v154 = vlaneseq
          %vm155 = vcmp.ge.s32.totalorder %v154, 0
          %vm156 = vcmp.lt.s32.totalorder %v154, 256
          %vm157 = vmand %vm155, %vm156
          %158 = vst.msk [vmem:[%s148] sm:$0x3] %vm157, 0.0
        $region32: #{tpu_custom_call.1} parent=23 // pred_fallthru
          _
        %v159 = vld [vmem:[%s130] sm:$0xff]
        %v161 = vcombine.high %v159, %v159
        %vm163 = vcmask 1043456
        %v164 = vsel %vm163, %v159, -inf
        %v165 = vrot.slane %v164, 4
        %v166 = vmax.f32 %v164, %v165
        %v167 = vrot.slane %v166, 2
        %v168 = vmax.f32 %v166, %v167
        %v169 = vrot.slane %v168, 1
        %v170 = vmax.f32 %v168, %v169
        %v171 = vsel %vm163, %v161, -inf
        %v172 = vrot.slane %v171, 4
        %v173 = vmax.f32 %v171, %v172
        %v174 = vrot.slane %v173, 2
        %v175 = vmax.f32 %v173, %v174
        %v176 = vrot.slane %v175, 1
        %v177 = vmax.f32 %v175, %v176
        %v180 = vcombine.low %v170, %v177
        %v182 = vsub.f32 %v159, %v180
        %v183 = vmul.f32 %v182, 1.442695
        %v184 = vpow.pop %v183
        %v186 = vcombine.high %v184, %v184
        %v188 = vsel %vm163, %v184, 0.0
        %v189 = vrot.slane %v188, 4
        %v190 = vadd.f32 %v188, %v189
        %v191 = vrot.slane %v190, 2
        %v192 = vadd.f32 %v190, %v191
        %v193 = vrot.slane %v192, 1
        %v194 = vadd.f32 %v192, %v193
        %v195 = vsel %vm163, %v186, 0.0
        %v196 = vrot.slane %v195, 4
        %v197 = vadd.f32 %v195, %v196
        %v198 = vrot.slane %v197, 2
        %v199 = vadd.f32 %v197, %v198
        %v200 = vrot.slane %v199, 1
        %v201 = vadd.f32 %v199, %v200
        %v202 = vmul.f32 %v184, %v182
        %v204 = vcombine.high %v202, %v202
        %v206 = vsel %vm163, %v202, 0.0
        %v207 = vrot.slane %v206, 4
        %v208 = vadd.f32 %v206, %v207
        %v209 = vrot.slane %v208, 2
        %v210 = vadd.f32 %v208, %v209
        %v211 = vrot.slane %v210, 1
        %v212 = vadd.f32 %v210, %v211
        %v213 = vsel %vm163, %v204, 0.0
        %v214 = vrot.slane %v213, 4
        %v215 = vadd.f32 %v213, %v214
        %v216 = vrot.slane %v215, 2
        %v217 = vadd.f32 %v215, %v216
        %v218 = vrot.slane %v217, 1
        %v219 = vadd.f32 %v217, %v218
        %v220 = vlog2.pop %v194
        %v221 = vmul.f32 %v220, 0.6931472
        %v222 = vlog2.pop %v201
        %v223 = vmul.f32 %v222, 0.6931472
        %v224 = vrcp.pop %v194
        %v225 = vmul.f32 %v212, %v224
        %v226 = vrcp.pop %v201
        %v227 = vmul.f32 %v219, %v226
        %v228 = vsub.f32 %v221, %v225
        %v229 = vsub.f32 %v223, %v227
        %s230 = smul.u32 %s23, 256
        %v231 = vlaneseq
        %v232 = vand.u32 %v231, 127
        %v233 = vadd.s32 %v232, 128
        %v234 = vstv %s230
        %v235 = vadd.s32 %v234, %v232
        %v236 = vadd.s32 %v234, %v233
        %vm237 = vcmp.lt.s32.totalorder %v235, 256
        %vm238 = vcmp.lt.s32.totalorder %v236, 256
        %v239 = vsel %vm237, %v228, 0.0
        %v240 = vsel %vm238, %v229, 0.0
        %v241 = vld [vmem:[%s148] sm:$0x3]
        %v244 = vcombine.low %v239, %v240
        %v246 = vunpack.c.l.s4 1966171168
        %v247 = vunpack.c.0.s8 %v246
        %v248 = vlaneseq
        %v249 = vshrl.u32 %v248, 7
        %v250 = vsub.s32 %v247, %v249
        %v251 = vrot.slane %v244, %v250
        %v253 = vunpack.c.l.s4 1966171168
        %v254 = vunpack.c.0.s8 %v253
        %v255 = vlaneseq
        %v256 = vshrl.u32 %v255, 7
        %v257 = vsub.s32 %v254, %v256
        %v258 = vrot.slane %v251, %v257
        %v260 = vadd.f32 %v241, %v258
        %v261 = vlaneseq
        %vm262 = vcmp.ge.s32.totalorder %v261, 0
        %vm263 = vcmp.lt.s32.totalorder %v261, 256
        %vm264 = vmand %vm262, %vm263
        %265 = vst.msk [vmem:[%s148] sm:$0x3] %vm264, %v260
        %s266 = sand.u32 %s66, 1
        %s267 = scalar_lea.sflag [#allocation4], %s266
        %s268 = sand.u32 %s66, 1
        %s269 = smul.addr %s268, 2
        %s270 = scalar_lea.vmem [#allocation5], %s269
        // Predicated region
        $region33: #{tpu_custom_call.1} parent=23 // pred_check
          %p271 = pneg %p76
        $region34: #{tpu_custom_call.1} parent=23 // pred_check_branch
          %273 = sbr.rel (%p271) target = $region36
        $region35: #{tpu_custom_call.1} parent=23 // pred_region
          %s275 = ssub.s32 32, 32
          %276 = vsyncadd %s267, %s275
          %s277 = smul.addr %s22, 2
          %s278 = smul.addr %s277, 16
          %s279 = scalar_lea.hbm %s1, %s278
          %s281 = sshll.u32 %s270, 4
          %s282 = int_to_ptr.vmem [resolvable:$true] %s281
          %284 = dma.vmem_to_hbm [thread:$0]  %s282, 32, %s279, %s267
        $region36: #{tpu_custom_call.1} parent=23 // pred_fallthru
          _
      $region24: #{tpu_custom_call.1} parent=5 // pred_fallthru
        _
      %p285 = scmp.le.s32.totalorder 2, %s13
      // Predicated region
      $region37: #{tpu_custom_call.1} parent=5 // pred_check
        %p286 = pneg %p285
      $region38: #{tpu_custom_call.1} parent=5 // pred_check_branch
        %288 = sbr.rel (%p286) target = $region40
      $region39: #{tpu_custom_call.1} parent=5 // pred_region
        %s289 = ssub.s32 %s13, 2
        // Predicated region
        $region41: #{tpu_custom_call.1} parent=39 // pred_check
          %p290 = pneg %p82
        $region42: #{tpu_custom_call.1} parent=39 // pred_check_branch
          %292 = sbr.rel (%p290) target = $region44
        $region43: #{tpu_custom_call.1} parent=39 // pred_region
          %s293 = sand.u32 %s67, 1
          %s294 = scalar_lea.sflag [#allocation4], %s293
          %s295 = sand.u32 %s67, 1
          %s296 = smul.addr %s295, 2
          %s297 = scalar_lea.vmem [#allocation5], %s296
          %298 = dma.done %s294, 32
        $region44: #{tpu_custom_call.1} parent=39 // pred_fallthru
          _
      $region40: #{tpu_custom_call.1} parent=5 // pred_fallthru
        _
    $region6: #{tpu_custom_call.1} parent=1 // loop_footer
      %s17 = sadd.s32 1, %s13
    $region7: #{tpu_custom_call.1} parent=1 // loop_footer_branch
      %12 = sbr.rel target = $region3
    $region8: #{tpu_custom_call.1} parent=1 // loop_exit
      _
    %299 = vsyncpa [#allocation3], 1
    %s300 = scalar_lea.sflag [#allocation3], 1
    %301 = vsyncpa %s300, 1
    %302 = vsyncpa [#allocation4], 1
    %s303 = scalar_lea.sflag [#allocation4], 1
    %304 = vsyncpa %s303, 1

</llo_original>
